<compile_context>
chip_gen: v6e
topology: v6e:2x2x1
jax: 0.10.0
libtpu: 0.0.40
codegen_flags: <defaults>
</compile_context>

<pallas_src>
import jax
import jax.numpy as jnp
from jax.experimental import pallas as pl
from jax.experimental.pallas import tpu as pltpu


def _round_up(x, m):
    return (x + m - 1) // m * m


def _vmem_capacity_bytes():
    """VMEM capacity of the attached TPU, with a conservative fallback."""
    try:
        return int(pltpu.get_tpu_info().vmem_capacity_bytes)
    except Exception:
        return 64 * 1024 * 1024  # v7x per-core VMEM (smallest current gen)


def _block_diag(w):
    """(G, d_in, d_out) -> block-diagonal (G*d_in, G*d_out)."""
    G, di, do = w.shape
    eye = jnp.eye(G, dtype=w.dtype)
    return jnp.einsum('gio,gh->giho', w, eye).reshape(G * di, G * do)


def _make_grouped_mlp_kernel(num_layers, compute_dtype):
    def kernel(x_ref, *refs):
        # refs = (w0, b0, w1, b1, ..., w_{L-1}, b_{L-1}, out_ref)
        out_ref = refs[-1]
        wb = refs[:-1]

        # Layer 0: fused across groups, x already bf16: (TM, d0) @ (d0, G*d1).
        h = jnp.dot(x_ref[...], wb[0][...], preferred_element_type=jnp.float32)
        h = h + wb[1][...]                                   # f32 bias add

        # Layers 1..L-1: block-diagonal fused matmul per layer.
        for l in range(1, num_layers):
            h = (h * jax.nn.sigmoid(h)).astype(compute_dtype)  # SiLU f32, carry bf16
            h = jnp.dot(h, wb[2 * l][...], preferred_element_type=jnp.float32)
            h = h + wb[2 * l + 1][...]

        out_ref[...] = h.astype(out_ref.dtype)               # one lane-dense store

    return kernel


def grouped_mlp(x, weights, biases, *, tm_target=1024, compute_dtype=jnp.bfloat16):
    """x: (B, N, D_IN).  weights[l]: (G, d_l, d_{l+1});  biases[l]: (G, d_{l+1}).
       Returns (B, N, G, D_OUT), matching the PyTorch GroupedMLP forward."""
    B, N, d_in = x.shape
    G = weights[0].shape[0]
    L = len(weights)
    d_out = weights[-1].shape[-1]
    M = B * N
    out_dtype = x.dtype

    n_out = G * d_out
    n_out_p = max(_round_up(n_out, 128), 128)   # lane-dense output width

    # ---- Fused weights / biases (built once at trace time) ----------------
    d1 = weights[0].shape[-1]
    fused_w = [jnp.transpose(weights[0], (1, 0, 2)).reshape(d_in, G * d1)]
    fused_b = [biases[0].reshape(1, G * d1)]
    for l in range(1, L):
        fused_w.append(_block_diag(weights[l]))               # (G*d_l, G*d_{l+1})
        fused_b.append(biases[l].reshape(1, G * weights[l].shape[-1]))
    if n_out_p != n_out:                                      # pad output lanes
        fused_w[-1] = jnp.pad(fused_w[-1], ((0, 0), (0, n_out_p - n_out)))
        fused_b[-1] = jnp.pad(fused_b[-1], ((0, 0), (0, n_out_p - n_out)))
    fused_w = [w.astype(compute_dtype) for w in fused_w]      # bf16 MXU operands
    fused_b = [b.astype(jnp.float32) for b in fused_b]        # f32 bias math

    # ---- Choose TM from a VMEM budget; guarantee >= 2 tiles when possible --
    bytes_weights = sum(w.size * 2 for w in fused_w) + sum(b.size * 4 for b in fused_b)
    resident = 2 * bytes_weights                              # default double-buffering
    per_row = 2 * 2 * d_in + 2 * 4 * n_out_p                  # x (bf16, 2buf) + out (f32, 2buf)
    per_row += sum(6 * w.shape[-1] for w in fused_w)          # f32 matmul result + bf16 act
    cap = _vmem_capacity_bytes()
    budget = max(int(0.5 * cap) - resident, 256 * 1024)
    tm_fit = max(8, (budget // per_row) // 8 * 8)
    tm = min(tm_target, tm_fit)
    if M < 2 * tm:                                            # keep both v7x TCs busy
        tm = max(8, _round_up(pl.cdiv(M, 2), 8))
    grid = (pl.cdiv(M, tm),)                                  # ragged last tile OK (no pad)

    need = resident + tm * per_row
    vmem_limit = int(min(0.9 * cap, max(32 * 1024 * 1024, 1.5 * need)))

    # ---- Operands / specs ---------------------------------------------------
    x_flat = x.reshape(M, d_in).astype(compute_dtype)         # halve x DMA bytes

    operands = [x_flat]
    in_specs = [pl.BlockSpec((tm, d_in), lambda m: (m, 0))]   # pipelined x tile
    for w, b in zip(fused_w, fused_b):
        operands += [w, b]
        in_specs += [
            pl.BlockSpec(w.shape, lambda m: (0, 0)),          # resident in VMEM
            pl.BlockSpec(b.shape, lambda m: (0, 0)),          # resident in VMEM
        ]

    out_flat = pl.pallas_call(
        _make_grouped_mlp_kernel(L, compute_dtype),
        out_shape=jax.ShapeDtypeStruct((M, n_out_p), out_dtype),
        grid_spec=pltpu.PrefetchScalarGridSpec(
            num_scalar_prefetch=0,
            grid=grid,
            in_specs=in_specs,
            out_specs=pl.BlockSpec((tm, n_out_p), lambda m: (m, 0)),
        ),
        compiler_params=pltpu.CompilerParams(
            dimension_semantics=("parallel",),
            vmem_limit_bytes=vmem_limit,
        ),
    )(*operands)

    out = out_flat[:, :n_out] if n_out_p != n_out else out_flat
    return out.reshape(B, N, G, d_out)


def grouped_mlp_reference(x, weights, biases):
    """Plain-JAX f32 reference matching the PyTorch GroupedMLP forward."""
    num_layers = len(weights)
    h = jnp.einsum('bni,gio->bngo', x, weights[0]) + biases[0][None, None, :, :]
    if num_layers > 1:
        h = h * jax.nn.sigmoid(h)
    for l in range(1, num_layers):
        h = jnp.einsum('bngi,gio->bngo', h, weights[l]) + biases[l][None, None, :, :]
        if l != num_layers - 1:
            h = h * jax.nn.sigmoid(h)
    return h


if __name__ == "__main__":
    # Small shapes consistent with the module: dims=(32, 64, 16), num_mlps=4.
    B, N = 2, 8
    dims = (32, 64, 16)
    G = 4

    key = jax.random.PRNGKey(0)
    keys = jax.random.split(key, 1 + 2 * (len(dims) - 1))

    x = jax.random.normal(keys[0], (B, N, dims[0]), dtype=jnp.float32)

    weights, biases = [], []
    for l, (d_in, d_out) in enumerate(zip(dims[:-1], dims[1:])):
        bound = 1.0 / jnp.sqrt(jnp.float32(d_in))
        w = jax.random.uniform(keys[1 + 2 * l], (G, d_in, d_out),
                               minval=-bound, maxval=bound, dtype=jnp.float32)
        b = jax.random.uniform(keys[2 + 2 * l], (G, d_out),
                               minval=-bound, maxval=bound, dtype=jnp.float32)
        weights.append(w)
        biases.append(b)

    out = grouped_mlp(x, weights, biases)
    out = jax.block_until_ready(out)

    ref = grouped_mlp_reference(x, weights, biases)
    assert out.shape == (B, N, G, dims[-1]), out.shape
    # bf16 MXU operands (f32 accumulation) -> loosened tolerance vs pure f32.
    assert jnp.allclose(out, ref, atol=3e-2, rtol=3e-2), \
        float(jnp.max(jnp.abs(out - ref)))

    print("KERNEL_OK")
</pallas_src>

<mosaic_0001>
module attributes {stable_mosaic.version = 11 : i64} {
  func.func @kernel(%arg0: i32, %arg1: memref<8x32xbf16, #tpu.memory_space<vmem>>, %arg2: memref<32x256xbf16, #tpu.memory_space<vmem>>, %arg3: memref<1x256xf32, #tpu.memory_space<vmem>>, %arg4: memref<256x128xbf16, #tpu.memory_space<vmem>>, %arg5: memref<1x128xf32, #tpu.memory_space<vmem>>, %arg6: memref<8x128xf32, #tpu.memory_space<vmem>>) attributes {dimension_semantics = [#tpu.dimension_semantics<parallel>], iteration_bounds = array<i64: 2>, scalar_prefetch = 0 : i64, scratch_operands = 0 : i64, tpu.core_type = #tpu.core_type<tc>, window_params = [{transform_indices = @transform_0, window_bounds = array<i64: 8, 32>}, {pipeline_mode = #tpu.pipeline_mode<synchronous>, transform_indices = @transform_1, window_bounds = array<i64: 32, 256>}, {pipeline_mode = #tpu.pipeline_mode<synchronous>, transform_indices = @transform_2, window_bounds = array<i64: 1, 256>}, {pipeline_mode = #tpu.pipeline_mode<synchronous>, transform_indices = @transform_3, window_bounds = array<i64: 256, 128>}, {pipeline_mode = #tpu.pipeline_mode<synchronous>, transform_indices = @transform_4, window_bounds = array<i64: 1, 128>}, {transform_indices = @transform_5, window_bounds = array<i64: 8, 128>}]} {
    %c0 = arith.constant 0 : index
    %c0_0 = arith.constant 0 : index
    %0 = vector.load %arg1[%c0, %c0_0] : memref<8x32xbf16, #tpu.memory_space<vmem>>, vector<8x32xbf16>
    %c0_1 = arith.constant 0 : index
    %c0_2 = arith.constant 0 : index
    %1 = vector.load %arg2[%c0_1, %c0_2] : memref<32x256xbf16, #tpu.memory_space<vmem>>, vector<32x256xbf16>
    %cst = arith.constant dense<0.000000e+00> : vector<8x256xf32>
    %2 = tpu.matmul %0, %1, %cst {dimension_numbers = #tpu.dot_dimension_numbers<[1], [0], [0], [1], [0, 0, 1, 1], [], []>} : vector<8x32xbf16>, vector<32x256xbf16>, vector<8x256xf32> -> vector<8x256xf32>
    %c0_3 = arith.constant 0 : index
    %c0_4 = arith.constant 0 : index
    %3 = vector.load %arg3[%c0_3, %c0_4] : memref<1x256xf32, #tpu.memory_space<vmem>>, vector<1x256xf32>
    %4 = vector.broadcast %3 : vector<1x256xf32> to vector<8x256xf32>
    %5 = arith.addf %2, %4 : vector<8x256xf32>
    %6 = arith.negf %5 : vector<8x256xf32>
    %7 = math.exp %6 : vector<8x256xf32>
    %cst_5 = arith.constant 1.000000e+00 : f32
    %8 = vector.broadcast %cst_5 : f32 to vector<8x256xf32>
    %9 = arith.addf %8, %7 : vector<8x256xf32>
    %10 = arith.divf %8, %9 : vector<8x256xf32>
    %11 = arith.mulf %5, %10 : vector<8x256xf32>
    %12 = arith.truncf %11 : vector<8x256xf32> to vector<8x256xbf16>
    %c0_6 = arith.constant 0 : index
    %c0_7 = arith.constant 0 : index
    %13 = vector.load %arg4[%c0_6, %c0_7] : memref<256x128xbf16, #tpu.memory_space<vmem>>, vector<256x128xbf16>
    %cst_8 = arith.constant dense<0.000000e+00> : vector<8x128xf32>
    %14 = tpu.matmul %12, %13, %cst_8 {dimension_numbers = #tpu.dot_dimension_numbers<[1], [0], [0], [1], [0, 0, 1, 1], [], []>} : vector<8x256xbf16>, vector<256x128xbf16>, vector<8x128xf32> -> vector<8x128xf32>
    %c0_9 = arith.constant 0 : index
    %c0_10 = arith.constant 0 : index
    %15 = vector.load %arg5[%c0_9, %c0_10] : memref<1x128xf32, #tpu.memory_space<vmem>>, vector<1x128xf32>
    %16 = vector.broadcast %15 : vector<1x128xf32> to vector<8x128xf32>
    %17 = arith.addf %14, %16 : vector<8x128xf32>
    %c0_11 = arith.constant 0 : index
    %c0_12 = arith.constant 0 : index
    %18 = vector.load %arg6[%c0_11, %c0_12] : memref<8x128xf32, #tpu.memory_space<vmem>>, vector<8x128xf32>
    tpu.vector_store %arg6[%c0_11, %c0_12], %17 {strides = array<i32>} : memref<8x128xf32, #tpu.memory_space<vmem>>, vector<8x128xf32>,
    return
  }
  func.func @transform_0(%arg0: i32) -> (i32, i32) {
    %c0_i32 = arith.constant 0 : i32
    %c0_i32_0 = arith.constant 0 : i32
    return %arg0, %c0_i32 : i32, i32
  }
  func.func @transform_1(%arg0: i32) -> (i32, i32) {
    %c0_i32 = arith.constant 0 : i32
    %c0_i32_0 = arith.constant 0 : i32
    %c0_i32_1 = arith.constant 0 : i32
    return %c0_i32, %c0_i32_0 : i32, i32
  }
  func.func @transform_2(%arg0: i32) -> (i32, i32) {
    %c0_i32 = arith.constant 0 : i32
    %c0_i32_0 = arith.constant 0 : i32
    %c0_i32_1 = arith.constant 0 : i32
    return %c0_i32, %c0_i32_0 : i32, i32
  }
  func.func @transform_3(%arg0: i32) -> (i32, i32) {
    %c0_i32 = arith.constant 0 : i32
    %c0_i32_0 = arith.constant 0 : i32
    %c0_i32_1 = arith.constant 0 : i32
    return %c0_i32, %c0_i32_0 : i32, i32
  }
  func.func @transform_4(%arg0: i32) -> (i32, i32) {
    %c0_i32 = arith.constant 0 : i32
    %c0_i32_0 = arith.constant 0 : i32
    %c0_i32_1 = arith.constant 0 : i32
    return %c0_i32, %c0_i32_0 : i32, i32
  }
  func.func @transform_5(%arg0: i32) -> (i32, i32) {
    %c0_i32 = arith.constant 0 : i32
    %c0_i32_0 = arith.constant 0 : i32
    return %arg0, %c0_i32 : i32, i32
  }
}

</mosaic_0001>

<llo_original>
// kernel: tpu_custom_call.1
$region0: #{tpu_custom_call.1}
  #allocation0 [shape = 'u32[]', space=smem, size = 0x4, offset = 0x4, fixed_abs, tag = 'smem constant byte address 0x4 - core index']
  #allocation1 [shape = 'u32[144,128]{1,0:T(1,128)}', space=vmem, size = 0x12000, scoped, tag = 'internal scratch']
  %s0 = inlined_call_operand.hbm [shape: bf16[16,32], index: 0, kind: input, shape index: {}]
  %s1 = inlined_call_operand.hbm [shape: bf16[32,256], index: 1, kind: input, shape index: {}]
  %s2 = inlined_call_operand.vmem [shape: f32[1,256], index: 2, kind: input, shape index: {}]
  %s3 = inlined_call_operand.hbm [shape: bf16[256,128], index: 3, kind: input, shape index: {}]
  %s4 = inlined_call_operand.vmem [shape: f32[1,128], index: 4, kind: input, shape index: {}]
  %s5 = inlined_call_operand.hbm [shape: f32[16,128], index: 5, kind: output, shape index: {}]
  %s6 = sld [smem:[#allocation0]]
  $region65: #{tpu_custom_call.1} parent=0
    _
  %s8 = ssub.s32 1, %s6
  %s9 = scalar_select 0, %s8, %s6
  $region1: #{tpu_custom_call.1} parent=0
    #allocation2 [shape = 'u8[4096]{0}', space=vmem, size = 0x1000, scoped, tag = 'input window, operand 0']
    #allocation3 [shape = 's32[2]{0}', space=sflag, size = 0x8, scoped, tag = 'scoped memory for tpu_custom_call.1']
    #allocation4 [shape = 's32[2]{0}', space=sflag, size = 0x8, scoped, tag = 'scoped memory for tpu_custom_call.1']
    #allocation5 [shape = 'u8[16384]{0}', space=vmem, size = 0x4000, scoped, tag = 'input window, operand 1, single buffered']
    #allocation6 [shape = 's32[1]{0}', space=sflag, size = 0x4, scoped, tag = 'scoped memory for tpu_custom_call.1']
    #allocation7 [shape = 'u8[65536]{0}', space=vmem, size = 0x10000, scoped, tag = 'input window, operand 3, single buffered']
    #allocation8 [shape = 'u8[8192]{0}', space=vmem, size = 0x2000, scoped, tag = 'output window, operand 0']
    %10 = vsyncpa [#allocation3], 0
    %s11 = scalar_lea.sflag [#allocation3], 1
    %12 = vsyncpa %s11, 0
    %13 = vsyncpa [#allocation6], 0
    %14 = vsyncpa [#allocation4], 0
    %s15 = scalar_lea.sflag [#allocation4], 1
    %16 = vsyncpa %s15, 0
    loop: start=0, step=1, limit=4
    $region2: #{tpu_custom_call.1} parent=1 // loop_pre_header
      _
    $region3: #{tpu_custom_call.1} parent=1 // loop_header
      %s18 = sphi 0, %s22
      %p19 = scmp.ge.s32.totalorder %s18, 4
      %s28 = sphi 0, %s30
      %s31 = sphi 0, %s28
      %s32 = sphi 0, %s31
      %s48 = sphi 0, %s32
      %s52 = sphi 0, %s52
      %s54 = sphi 0, %s52
      %s55 = sphi 0, %s54
      %s69 = sphi 0, %s55
      %s73 = sphi 0, %s73
      %s75 = sphi 0, %s73
      %s76 = sphi 0, %s75
      %s90 = sphi 0, %s76
      %s94 = sphi 0, %s94
      %s96 = sphi 0, %s94
      %s97 = sphi 0, %s96
      %s111 = sphi 0, %s97
      %s115 = sphi 0, %s115
      %s117 = sphi 0, %s115
      %s118 = sphi 0, %s117
      %s132 = sphi 0, %s118
      %s138 = sphi 0, %s140
      %s141 = sphi 0, %s138
      %s142 = sphi 0, %s141
      %s158 = sphi 0, %s142
    $region4: #{tpu_custom_call.1} parent=1 // loop_header_branch
      %21 = sbr.rel (%p19) target = $region8
    $region5: #{tpu_custom_call.1} parent=1 // loop_body
      %s23 = ssub.s32 %s18, 1
      %s24 = ssub.s32 %s18, 2
      %s25 = sadd.s32 %s18, 1
      %s26 = ssub.s32 %s18, %s25
      %p27 = scmp.eq.s32.totalorder %s26, 0
      %s29 = sadd.s32 %s28, 1
      %s30 = scalar_select %p27, %s28, %s29
      %p33 = pneg %p27
      %p34 = scmp.eq.s32.totalorder %s18, 1
      %p35 = por %p33, %p34
      %p36 = scmp.ne.s32.totalorder %s28, %s31
      %p37 = scmp.eq.s32.totalorder %s18, 0
      %p38 = por %p36, %p37
      %p39 = scmp.ne.s32.totalorder %s28, %s31
      %p40 = scmp.eq.s32.totalorder %s23, 1
      %p41 = por %p39, %p40
      %p42 = scmp.ne.s32.totalorder %s31, %s32
      %p43 = scmp.eq.s32.totalorder %s23, 0
      %p44 = por %p42, %p43
      %p45 = scmp.ne.s32.totalorder %s31, %s32
      %p46 = scmp.eq.s32.totalorder %s24, 1
      %p47 = por %p45, %p46
      %p49 = scmp.ne.s32.totalorder %s32, %s48
      %p50 = scmp.eq.s32.totalorder %s24, 0
      %p51 = por %p49, %p50
      %s53 = sadd.s32 %s52, 1
      %p56 = scmp.eq.s32.totalorder %s18, 1
      %p57 = scmp.ne.s32.totalorder %s52, %s54
      %p58 = scmp.eq.s32.totalorder %s18, 0
      %p59 = por %p57, %p58
      %p60 = scmp.ne.s32.totalorder %s52, %s54
      %p61 = scmp.eq.s32.totalorder %s23, 1
      %p62 = por %p60, %p61
      %p63 = scmp.ne.s32.totalorder %s54, %s55
      %p64 = scmp.eq.s32.totalorder %s23, 0
      %p65 = por %p63, %p64
      %p66 = scmp.ne.s32.totalorder %s54, %s55
      %p67 = scmp.eq.s32.totalorder %s24, 1
      %p68 = por %p66, %p67
      %p70 = scmp.ne.s32.totalorder %s55, %s69
      %p71 = scmp.eq.s32.totalorder %s24, 0
      %p72 = por %p70, %p71
      %s74 = sadd.s32 %s73, 1
      %p77 = scmp.eq.s32.totalorder %s18, 1
      %p78 = scmp.ne.s32.totalorder %s73, %s75
      %p79 = scmp.eq.s32.totalorder %s18, 0
      %p80 = por %p78, %p79
      %p81 = scmp.ne.s32.totalorder %s73, %s75
      %p82 = scmp.eq.s32.totalorder %s23, 1
      %p83 = por %p81, %p82
      %p84 = scmp.ne.s32.totalorder %s75, %s76
      %p85 = scmp.eq.s32.totalorder %s23, 0
      %p86 = por %p84, %p85
      %p87 = scmp.ne.s32.totalorder %s75, %s76
      %p88 = scmp.eq.s32.totalorder %s24, 1
      %p89 = por %p87, %p88
      %p91 = scmp.ne.s32.totalorder %s76, %s90
      %p92 = scmp.eq.s32.totalorder %s24, 0
      %p93 = por %p91, %p92
      %s95 = sadd.s32 %s94, 1
      %p98 = scmp.eq.s32.totalorder %s18, 1
      %p99 = scmp.ne.s32.totalorder %s94, %s96
      %p100 = scmp.eq.s32.totalorder %s18, 0
      %p101 = por %p99, %p100
      %p102 = scmp.ne.s32.totalorder %s94, %s96
      %p103 = scmp.eq.s32.totalorder %s23, 1
      %p104 = por %p102, %p103
      %p105 = scmp.ne.s32.totalorder %s96, %s97
      %p106 = scmp.eq.s32.totalorder %s23, 0
      %p107 = por %p105, %p106
      %p108 = scmp.ne.s32.totalorder %s96, %s97
      %p109 = scmp.eq.s32.totalorder %s24, 1
      %p110 = por %p108, %p109
      %p112 = scmp.ne.s32.totalorder %s97, %s111
      %p113 = scmp.eq.s32.totalorder %s24, 0
      %p114 = por %p112, %p113
      %s116 = sadd.s32 %s115, 1
      %p119 = scmp.eq.s32.totalorder %s18, 1
      %p120 = scmp.ne.s32.totalorder %s115, %s117
      %p121 = scmp.eq.s32.totalorder %s18, 0
      %p122 = por %p120, %p121
      %p123 = scmp.ne.s32.totalorder %s115, %s117
      %p124 = scmp.eq.s32.totalorder %s23, 1
      %p125 = por %p123, %p124
      %p126 = scmp.ne.s32.totalorder %s117, %s118
      %p127 = scmp.eq.s32.totalorder %s23, 0
      %p128 = por %p126, %p127
      %p129 = scmp.ne.s32.totalorder %s117, %s118
      %p130 = scmp.eq.s32.totalorder %s24, 1
      %p131 = por %p129, %p130
      %p133 = scmp.ne.s32.totalorder %s118, %s132
      %p134 = scmp.eq.s32.totalorder %s24, 0
      %p135 = por %p133, %p134
      %s136 = ssub.s32 %s18, %s25
      %p137 = scmp.eq.s32.totalorder %s136, 0
      %s139 = sadd.s32 %s138, 1
      %s140 = scalar_select %p137, %s138, %s139
      %p143 = pneg %p137
      %p144 = scmp.eq.s32.totalorder %s18, 1
      %p145 = por %p143, %p144
      %p146 = scmp.ne.s32.totalorder %s138, %s141
      %p147 = scmp.eq.s32.totalorder %s18, 0
      %p148 = por %p146, %p147
      %p149 = scmp.ne.s32.totalorder %s138, %s141
      %p150 = scmp.eq.s32.totalorder %s23, 1
      %p151 = por %p149, %p150
      %p152 = scmp.ne.s32.totalorder %s141, %s142
      %p153 = scmp.eq.s32.totalorder %s23, 0
      %p154 = por %p152, %p153
      %p155 = scmp.ne.s32.totalorder %s141, %s142
      %p156 = scmp.eq.s32.totalorder %s24, 1
      %p157 = por %p155, %p156
      %p159 = scmp.ne.s32.totalorder %s142, %s158
      %p160 = scmp.eq.s32.totalorder %s24, 0
      %p161 = por %p159, %p160
      %p162 = scmp.le.s32.totalorder 1, %s18
      %p163 = scmp.lt.s32.totalorder %s18, 3
      %p164 = pnand %p162, %p163
      %p165 = pneg %p164
      // Predicated region
      $region9: #{tpu_custom_call.1} parent=5 // pred_check
        _
      $region10: #{tpu_custom_call.1} parent=5 // pred_check_branch
        %167 = sbr.rel (%p164) target = $region12
      $region11: #{tpu_custom_call.1} parent=5 // pred_region
        %s168 = ssub.s32 %s18, 1
        // Predicated region
        $region13: #{tpu_custom_call.1} parent=11 // pred_check
          %p169 = pneg %p65
        $region14: #{tpu_custom_call.1} parent=11 // pred_check_branch
          %171 = sbr.rel (%p169) target = $region16
        $region15: #{tpu_custom_call.1} parent=11 // pred_region
          %s173 = ssub.s32 512, 512
          %174 = vsyncadd [#allocation6], %s173
          %s175 = sshll.u32 [#allocation5], 4
          %s176 = int_to_ptr.vmem [resolvable:$true] %s175
          %181 = dma.hbm_to_vmem [thread:$0]  %s1, 512, %s176, [#allocation6], 128, 128, 8
        $region16: #{tpu_custom_call.1} parent=11 // pred_fallthru
          _
        // Predicated region
        $region17: #{tpu_custom_call.1} parent=11 // pred_check
          %p182 = pneg %p86
        $region18: #{tpu_custom_call.1} parent=11 // pred_check_branch
          %184 = sbr.rel (%p182) target = $region20
        $region19: #{tpu_custom_call.1} parent=11 // pred_region
          _
        $region20: #{tpu_custom_call.1} parent=11 // pred_fallthru
          _
        // Predicated region
        $region21: #{tpu_custom_call.1} parent=11 // pred_check
          %p185 = pneg %p107
        $region22: #{tpu_custom_call.1} parent=11 // pred_check_branch
          %187 = sbr.rel (%p185) target = $region24
        $region23: #{tpu_custom_call.1} parent=11 // pred_region
          %s189 = ssub.s32 2048, 2048
          %190 = vsyncadd [#allocation6], %s189
          %s191 = sshll.u32 [#allocation7], 4
          %s192 = int_to_ptr.vmem [resolvable:$true] %s191
          %197 = dma.hbm_to_vmem [thread:$0]  %s3, 2048, %s192, [#allocation6], 64, 64, 4
        $region24: #{tpu_custom_call.1} parent=11 // pred_fallthru
          _
        // Predicated region
        $region25: #{tpu_custom_call.1} parent=11 // pred_check
          %p198 = pneg %p128
        $region26: #{tpu_custom_call.1} parent=11 // pred_check_branch
          %200 = sbr.rel (%p198) target = $region28
        $region27: #{tpu_custom_call.1} parent=11 // pred_region
          _
        $region28: #{tpu_custom_call.1} parent=11 // pred_fallthru
          _
      $region12: #{tpu_custom_call.1} parent=5 // pred_fallthru
        _
      %p201 = scmp.lt.s32.totalorder %s18, 2
      // Predicated region
      $region29: #{tpu_custom_call.1} parent=5 // pred_check
        %p202 = pneg %p201
      $region30: #{tpu_custom_call.1} parent=5 // pred_check_branch
        %204 = sbr.rel (%p202) target = $region32
      $region31: #{tpu_custom_call.1} parent=5 // pred_region
        // Predicated region
        $region33: #{tpu_custom_call.1} parent=31 // pred_check
          %p205 = pneg %p38
        $region34: #{tpu_custom_call.1} parent=31 // pred_check_branch
          %207 = sbr.rel (%p205) target = $region36
        $region35: #{tpu_custom_call.1} parent=31 // pred_region
          %s208 = sand.u32 %s28, 1
          %s209 = scalar_lea.sflag [#allocation3], %s208
          %s210 = sand.u32 %s28, 1
          %s211 = smul.addr %s210, 4
          %s212 = scalar_lea.vmem [#allocation2], %s211
          %s214 = ssub.s32 64, 64
          %215 = vsyncadd %s209, %s214
          %s216 = smul.addr %s18, 64
          %s217 = scalar_lea.hbm %s0, %s216
          %s219 = sshll.u32 %s212, 4
          %s220 = int_to_ptr.vmem [resolvable:$true] %s219
          %222 = dma.hbm_to_vmem [thread:$0]  %s217, 64, %s220, %s209
        $region36: #{tpu_custom_call.1} parent=31 // pred_fallthru
          _
      $region32: #{tpu_custom_call.1} parent=5 // pred_fallthru
        _
      %p223 = scmp.le.s32.totalorder 1, %s18
      %p224 = scmp.lt.s32.totalorder %s18, 3
      %p225 = pnand %p223, %p224
      %p226 = pneg %p225
      // Predicated region
      $region37: #{tpu_custom_call.1} parent=5 // pred_check
        _
      $region38: #{tpu_custom_call.1} parent=5 // pred_check_branch
        %228 = sbr.rel (%p225) target = $region40
      $region39: #{tpu_custom_call.1} parent=5 // pred_region
        %s229 = ssub.s32 %s18, 1
        %s230 = sand.u32 %s31, 1
        %s231 = scalar_lea.sflag [#allocation3], %s230
        %s232 = sand.u32 %s31, 1
        %s233 = smul.addr %s232, 4
        %s234 = scalar_lea.vmem [#allocation2], %s233
        // Predicated region
        $region41: #{tpu_custom_call.1} parent=39 // pred_check
          %p235 = pneg %p44
        $region42: #{tpu_custom_call.1} parent=39 // pred_check_branch
          %237 = sbr.rel (%p235) target = $region44
        $region43: #{tpu_custom_call.1} parent=39 // pred_region
          %238 = dma.done %s231, 64
        $region44: #{tpu_custom_call.1} parent=39 // pred_fallthru
          _
        // Predicated region
        $region45: #{tpu_custom_call.1} parent=39 // pred_check
          %p239 = pneg %p65
        $region46: #{tpu_custom_call.1} parent=39 // pred_check_branch
          %241 = sbr.rel (%p239) target = $region48
        $region47: #{tpu_custom_call.1} parent=39 // pred_region
          %242 = dma.done [#allocation6], 512
        $region48: #{tpu_custom_call.1} parent=39 // pred_fallthru
          _
        // Predicated region
        $region49: #{tpu_custom_call.1} parent=39 // pred_check
          %p243 = pneg %p107
        $region50: #{tpu_custom_call.1} parent=39 // pred_check_branch
          %245 = sbr.rel (%p243) target = $region52
        $region51: #{tpu_custom_call.1} parent=39 // pred_region
          %246 = dma.done [#allocation6], 2048
        $region52: #{tpu_custom_call.1} parent=39 // pred_fallthru
          _
        %s247 = sand.u32 %s31, 1
        %s248 = scalar_lea.sflag [#allocation3], %s247
        %s249 = sand.u32 %s31, 1
        %s250 = smul.addr %s249, 4
        %s251 = scalar_lea.vmem [#allocation2], %s250
        %p252 = pneg %p44
        %p253 = pneg %p41
        %p254 = pneg %p65
        %p255 = pneg %p62
        %p256 = pneg %p86
        %p257 = pneg %p83
        %p258 = pneg %p107
        %p259 = pneg %p104
        %p260 = pneg %p128
        %p261 = pneg %p125
        %p262 = pneg %p154
        %p263 = pneg %p151
        %s264 = sand.u32 %s141, 1
        %s265 = scalar_lea.sflag [#allocation4], %s264
        %s266 = sand.u32 %s141, 1
        %s267 = smul.addr %s266, 8
        %s268 = scalar_lea.vmem [#allocation8], %s267
        %v270 = vld [vmem:[%s234] sm:$0xf]
        %v271 = vld [vmem:[#allocation5] sm:$0xff]
        %v272 = vld [vmem:[#allocation5 + $0x8] sm:$0xff]
        %v273 = vld [vmem:[#allocation5 + $0x10] sm:$0xff]
        %v274 = vld [vmem:[#allocation5 + $0x18] sm:$0xff]
        %v275 = vld [vmem:[%s2] sm:$0x3]
        %v277 = vlaneseq
        %v278 = vshrl.u32 %v277, 7
        %v279 = vsub.s32 0, %v278
        %v280 = vrot.slane %v275, %v279
        %v281 = vlaneseq
        %v282 = vshrl.u32 %v281, 7
        %v283 = vsub.s32 1, %v282
        %v284 = vrot.slane %v275, %v283
        %v291 = vunpack.c.l.b16 %v271
        %v292 = vunpack.c.h.b16 %v271
        %v293 = vunpack.c.l.b16 %v272
        %v294 = vunpack.c.h.b16 %v272
        %v295 = vunpack.c.l.b16 %v273
        %v296 = vunpack.c.h.b16 %v273
        %v297 = vunpack.c.l.b16 %v274
        %v298 = vunpack.c.h.b16 %v274
        %v299 = vpack.c.b16 %v293, %v291
        %v300 = vpack.c.b16 %v294, %v292
        %v301 = vpack.c.b16 %v297, %v295
        %v302 = vpack.c.b16 %v298, %v296
        %vm307 = vcmask 261120
        %v309 = vsel %vm307, %v270, 0
        %311 = vmatprep.subr.bf16.mxu0 0
        %312 = vmatpush1.bf16.msra.mxu0 0
        %313 = vmatprep.subr.bf16.mxu0 0
        %314 = vmatpush1.bf16.msra.mxu0 0
        %315 = vmatprep.subr.bf16.mxu0 0
        %316 = vmatpush1.bf16.msra.mxu0 0
        %317 = vmatprep.subr.bf16.mxu0 0
        %318 = vmatpush1.bf16.msra.mxu0 0
        %319 = vmatprep.subr.bf16.mxu0 0
        %320 = vmatpush1.bf16.msra.mxu0 0
        %321 = vmatprep.subr.bf16.mxu0 0
        %322 = vmatpush1.bf16.msra.mxu0 0
        %323 = vmatprep.subr.bf16.mxu0 %v302
        %324 = vmatpush1.bf16.msra.mxu0 %v301
        %325 = vmatprep.subr.bf16.mxu0 %v300
        %326 = vmatpush1.bf16.msra.mxu0 %v299
        %327 = vmatprep.subr.bf16.mxu0 0
        %328 = vmatpush2.bf16.msra.mxu0 0
        %329 = vmatprep.subr.bf16.mxu0 0
        %330 = vmatpush2.bf16.msra.mxu0 0
        %331 = vmatprep.subr.bf16.mxu0 0
        %332 = vmatpush2.bf16.msra.mxu0 0
        %333 = vmatprep.subr.bf16.mxu0 0
        %334 = vmatpush2.bf16.msra.mxu0 0
        %335 = vmatprep.subr.bf16.mxu0 0
        %336 = vmatpush2.bf16.msra.mxu0 0
        %337 = vmatprep.subr.bf16.mxu0 0
        %338 = vmatpush2.bf16.msra.mxu0 0
        %339 = vmatprep.subr.bf16.mxu0 0
        %340 = vmatpush2.bf16.msra.mxu0 0
        %341 = vmatprep.subr.bf16.mxu0 0
        %342 = vmatpush2.bf16.msra.mxu0 0
        %343 = vmatprep.mubr.bf16.mxu0 0
        %344 = vmatmul.mubr.bf16.gmra.mxu0 %v309
        %v345 = vpop.f32.mrf.mxu0
        %v346 = vadd.f32 %v280, %v345
        %v347 = vpop.f32.mrf.mxu0
        %v348 = vadd.f32 %v284, %v347
        %v349 = vpop.f32.mrf.mxu0
        %v350 = vpop.f32.mrf.mxu0
        %351 = vdwg.mxu0
        %v352 = vxor.u32 %v346, 2147483648
        %v353 = vxor.u32 %v348, 2147483648
        %v354 = vmul.f32 %v352, 1.442695
        %v355 = vpow.pop %v354
        %v356 = vmul.f32 %v353, 1.442695
        %v357 = vpow.pop %v356
        %v358 = vadd.f32 %v355, 1.0
        %v359 = vadd.f32 %v357, 1.0
        %v360 = vrcp.pop %v358
        %v361 = vmul.f32 1.0, %v360
        %v362 = vrcp.pop %v359
        %v363 = vmul.f32 1.0, %v362
        %v364 = vmul.f32 %v346, %v361
        %v365 = vmul.f32 %v348, %v363
        %v366 = vpack.c.bf16 %v364, %v364
        %v367 = vpack.c.bf16 %v365, %v365
        %v368 = vld [vmem:[#allocation7] sm:$0xf]
        %v369 = vld [vmem:[#allocation7 + $0x4] sm:$0xf]
        %v370 = vld [vmem:[#allocation7 + $0x8] sm:$0xf]
        %v371 = vld [vmem:[#allocation7 + $0xc] sm:$0xf]
        %v372 = vld [vmem:[#allocation7 + $0x10] sm:$0xf]
        %v373 = vld [vmem:[#allocation7 + $0x14] sm:$0xf]
        %v374 = vld [vmem:[#allocation7 + $0x18] sm:$0xf]
        %v375 = vld [vmem:[#allocation7 + $0x1c] sm:$0xf]
        %v376 = vld [vmem:[#allocation7 + $0x20] sm:$0xf]
        %v377 = vld [vmem:[#allocation7 + $0x24] sm:$0xf]
        %v378 = vld [vmem:[#allocation7 + $0x28] sm:$0xf]
        %v379 = vld [vmem:[#allocation7 + $0x2c] sm:$0xf]
        %v380 = vld [vmem:[#allocation7 + $0x30] sm:$0xf]
        %v381 = vld [vmem:[#allocation7 + $0x34] sm:$0xf]
        %v382 = vld [vmem:[#allocation7 + $0x38] sm:$0xf]
        %v383 = vld [vmem:[#allocation7 + $0x3c] sm:$0xf]
        %v384 = vld [vmem:[#allocation7 + $0x40] sm:$0xf]
        %v385 = vld [vmem:[#allocation7 + $0x44] sm:$0xf]
        %v386 = vld [vmem:[#allocation7 + $0x48] sm:$0xf]
        %v387 = vld [vmem:[#allocation7 + $0x4c] sm:$0xf]
        %v388 = vld [vmem:[#allocation7 + $0x50] sm:$0xf]
        %v389 = vld [vmem:[#allocation7 + $0x54] sm:$0xf]
        %v390 = vld [vmem:[#allocation7 + $0x58] sm:$0xf]
        %v391 = vld [vmem:[#allocation7 + $0x5c] sm:$0xf]
        %v392 = vld [vmem:[#allocation7 + $0x60] sm:$0xf]
        %v393 = vld [vmem:[#allocation7 + $0x64] sm:$0xf]
        %v394 = vld [vmem:[#allocation7 + $0x68] sm:$0xf]
        %v395 = vld [vmem:[#allocation7 + $0x6c] sm:$0xf]
        %v396 = vld [vmem:[#allocation7 + $0x70] sm:$0xf]
        %v397 = vld [vmem:[#allocation7 + $0x74] sm:$0xf]
        %v398 = vld [vmem:[#allocation7 + $0x78] sm:$0xf]
        %v399 = vld [vmem:[#allocation7 + $0x7c] sm:$0xf]
        %v400 = vld [vmem:[%s4] sm:$0x1]
        %v402 = vlaneseq
        %v403 = vshrl.u32 %v402, 7
        %v404 = vsub.s32 0, %v403
        %v405 = vrot.slane %v400, %v404
        %v439 = vunpack.c.l.b16 %v368
        %v440 = vunpack.c.l.b16 %v369
        %v441 = vunpack.c.l.b16 %v370
        %v442 = vunpack.c.l.b16 %v371
        %v443 = vunpack.c.l.b16 %v372
        %v444 = vunpack.c.l.b16 %v373
        %v445 = vunpack.c.l.b16 %v374
        %v446 = vunpack.c.l.b16 %v375
        %v447 = vunpack.c.l.b16 %v376
        %v448 = vunpack.c.l.b16 %v377
        %v449 = vunpack.c.l.b16 %v378
        %v450 = vunpack.c.l.b16 %v379
        %v451 = vunpack.c.l.b16 %v380
        %v452 = vunpack.c.l.b16 %v381
        %v453 = vunpack.c.l.b16 %v382
        %v454 = vunpack.c.l.b16 %v383
        %v455 = vunpack.c.l.b16 %v384
        %v456 = vunpack.c.l.b16 %v385
        %v457 = vunpack.c.l.b16 %v386
        %v458 = vunpack.c.l.b16 %v387
        %v459 = vunpack.c.l.b16 %v388
        %v460 = vunpack.c.l.b16 %v389
        %v461 = vunpack.c.l.b16 %v390
        %v462 = vunpack.c.l.b16 %v391
        %v463 = vunpack.c.l.b16 %v392
        %v464 = vunpack.c.l.b16 %v393
        %v465 = vunpack.c.l.b16 %v394
        %v466 = vunpack.c.l.b16 %v395
        %v467 = vunpack.c.l.b16 %v396
        %v468 = vunpack.c.l.b16 %v397
        %v469 = vunpack.c.l.b16 %v398
        %v470 = vunpack.c.l.b16 %v399
        %v471 = vpack.c.b16 %v440, %v439
        %v472 = vpack.c.b16 %v442, %v441
        %v473 = vpack.c.b16 %v444, %v443
        %v474 = vpack.c.b16 %v446, %v445
        %v475 = vpack.c.b16 %v448, %v447
        %v476 = vpack.c.b16 %v450, %v449
        %v477 = vpack.c.b16 %v452, %v451
        %v478 = vpack.c.b16 %v454, %v453
        %v479 = vpack.c.b16 %v456, %v455
        %v480 = vpack.c.b16 %v458, %v457
        %v481 = vpack.c.b16 %v460, %v459
        %v482 = vpack.c.b16 %v462, %v461
        %v483 = vpack.c.b16 %v464, %v463
        %v484 = vpack.c.b16 %v466, %v465
        %v485 = vpack.c.b16 %v468, %v467
        %v486 = vpack.c.b16 %v470, %v469
        %503 = vmatprep.subr.bf16.mxu0 0
        %504 = vmatpush1.bf16.msra.mxu0 %v478
        %505 = vmatprep.subr.bf16.mxu0 0
        %506 = vmatpush1.bf16.msra.mxu0 %v477
        %507 = vmatprep.subr.bf16.mxu0 0
        %508 = vmatpush1.bf16.msra.mxu0 %v476
        %509 = vmatprep.subr.bf16.mxu0 0
        %510 = vmatpush1.bf16.msra.mxu0 %v475
        %511 = vmatprep.subr.bf16.mxu0 0
        %512 = vmatpush1.bf16.msra.mxu0 %v474
        %513 = vmatprep.subr.bf16.mxu0 0
        %514 = vmatpush1.bf16.msra.mxu0 %v473
        %515 = vmatprep.subr.bf16.mxu0 0
        %516 = vmatpush1.bf16.msra.mxu0 %v472
        %517 = vmatprep.subr.bf16.mxu0 0
        %518 = vmatpush1.bf16.msra.mxu0 %v471
        %519 = vmatprep.subr.bf16.mxu0 0
        %520 = vmatpush2.bf16.msra.mxu0 %v486
        %521 = vmatprep.subr.bf16.mxu0 0
        %522 = vmatpush2.bf16.msra.mxu0 %v485
        %523 = vmatprep.subr.bf16.mxu0 0
        %524 = vmatpush2.bf16.msra.mxu0 %v484
        %525 = vmatprep.subr.bf16.mxu0 0
        %526 = vmatpush2.bf16.msra.mxu0 %v483
        %527 = vmatprep.subr.bf16.mxu0 0
        %528 = vmatpush2.bf16.msra.mxu0 %v482
        %529 = vmatprep.subr.bf16.mxu0 0
        %530 = vmatpush2.bf16.msra.mxu0 %v481
        %531 = vmatprep.subr.bf16.mxu0 0
        %532 = vmatpush2.bf16.msra.mxu0 %v480
        %533 = vmatprep.subr.bf16.mxu0 0
        %534 = vmatpush2.bf16.msra.mxu0 %v479
        %535 = vmatprep.mubr.bf16.mxu0 %v367
        %536 = vmatmul.mubr.bf16.gmra.mxu0 %v366
        %v537 = vpop.f32.mrf.mxu0
        %v538 = vadd.f32 %v405, %v537
        %v539 = vpop.f32.mrf.mxu0
        %v540 = vpop.f32.mrf.mxu0
        %v541 = vpop.f32.mrf.mxu0
        %542 = vdwg.mxu0
        %543 = vst [vmem:[%s268] sm:$0xff] %v538
        %s544 = sand.u32 %s141, 1
        %s545 = scalar_lea.sflag [#allocation4], %s544
        %s546 = sand.u32 %s141, 1
        %s547 = smul.addr %s546, 8
        %s548 = scalar_lea.vmem [#allocation8], %s547
        // Predicated region
        $region53: #{tpu_custom_call.1} parent=39 // pred_check
          %p549 = pneg %p151
        $region54: #{tpu_custom_call.1} parent=39 // pred_check_branch
          %551 = sbr.rel (%p549) target = $region56
        $region55: #{tpu_custom_call.1} parent=39 // pred_region
          %s553 = ssub.s32 128, 128
          %554 = vsyncadd %s545, %s553
          %s555 = smul.addr %s23, 128
          %s556 = scalar_lea.hbm %s5, %s555
          %s558 = sshll.u32 %s548, 4
          %s559 = int_to_ptr.vmem [resolvable:$true] %s558
          %561 = dma.vmem_to_hbm [thread:$0]  %s559, 128, %s556, %s545
        $region56: #{tpu_custom_call.1} parent=39 // pred_fallthru
          _
      $region40: #{tpu_custom_call.1} parent=5 // pred_fallthru
        _
      %p562 = scmp.le.s32.totalorder 2, %s18
      // Predicated region
      $region57: #{tpu_custom_call.1} parent=5 // pred_check
        %p563 = pneg %p562
      $region58: #{tpu_custom_call.1} parent=5 // pred_check_branch
        %565 = sbr.rel (%p563) target = $region60
      $region59: #{tpu_custom_call.1} parent=5 // pred_region
        %s566 = ssub.s32 %s18, 2
        // Predicated region
        $region61: #{tpu_custom_call.1} parent=59 // pred_check
          %p567 = pneg %p157
        $region62: #{tpu_custom_call.1} parent=59 // pred_check_branch
          %569 = sbr.rel (%p567) target = $region64
        $region63: #{tpu_custom_call.1} parent=59 // pred_region
          %s570 = sand.u32 %s142, 1
          %s571 = scalar_lea.sflag [#allocation4], %s570
          %s572 = sand.u32 %s142, 1
          %s573 = smul.addr %s572, 8
          %s574 = scalar_lea.vmem [#allocation8], %s573
          %575 = dma.done %s571, 128
        $region64: #{tpu_custom_call.1} parent=59 // pred_fallthru
          _
      $region60: #{tpu_custom_call.1} parent=5 // pred_fallthru
        _
    $region6: #{tpu_custom_call.1} parent=1 // loop_footer
      %s22 = sadd.s32 1, %s18
    $region7: #{tpu_custom_call.1} parent=1 // loop_footer_branch
      %17 = sbr.rel target = $region3
    $region8: #{tpu_custom_call.1} parent=1 // loop_exit
      _
    %576 = vsyncpa [#allocation3], 1
    %s577 = scalar_lea.sflag [#allocation3], 1
    %578 = vsyncpa %s577, 1
    %579 = vsyncpa [#allocation6], 1
    %580 = vsyncpa [#allocation4], 1
    %s581 = scalar_lea.sflag [#allocation4], 1
    %582 = vsyncpa %s581, 1

</llo_original>
